<compile_context>
chip_gen: v6e
topology: v6e:2x2x1
jax: 0.10.0
libtpu: 0.0.40
codegen_flags: <defaults>
</compile_context>

<pallas_src>
import functools

import jax
import jax.numpy as jnp
import numpy as np
from jax import lax
from jax.experimental import pallas as pl
from jax.experimental.pallas import tpu as pltpu

IN_FEATURES = 3
H1, H2, H3, H4 = 16, 32, 64, 128

# dot_general dimension numbers: contract the last dim of both operands
# (A @ B.T), i.e. the "NT" matmul used by flash attention for q @ k.T.
_NT_DIMS = (((1,), (1,)), ((), ()))


def encoder_kernel(x_ref,
                   w1_ref, b1_ref,
                   w2_ref, b2_ref,
                   w3_ref, b3_ref,
                   w4_ref, b4_ref,
                   o_ref, acc_ref, *, n_pts, tile_n):
    pid = pl.program_id(0)
    nsteps = pl.num_programs(0)

    @pl.when(pid == 0)
    def _init():
        acc_ref[...] = jnp.zeros_like(acc_ref)

    xb = x_ref[...]                     # (tile_n, 3); tail rows may be garbage
    cdt = w1_ref.dtype                  # compute dtype of the streamed path

    # Layer 1, lane-dense: (16, tile_n) = W1 @ xb^T  (contract the feature dim).
    h = lax.dot_general(w1_ref[...], xb, _NT_DIMS,
                        preferred_element_type=jnp.float32)
    h = jnp.maximum(h + b1_ref[...], 0.0)                         # f32 epilogue

    # Layers 2/3: standard (H, K) @ (K, tile_n) matmuls, point axis on lanes.
    h = jnp.dot(w2_ref[...], h.astype(cdt),
                preferred_element_type=jnp.float32)
    h = jnp.maximum(h + b2_ref[...], 0.0)
    h = jnp.dot(w3_ref[...], h.astype(cdt),
                preferred_element_type=jnp.float32)
    h = jnp.maximum(h + b3_ref[...], 0.0)                         # (64, tile_n) f32

    is_last = pid == nsteps - 1

    @pl.when(jnp.logical_not(is_last))
    def _accumulate():
        # Full tiles: unmasked lane-reduction (XLU) into the resident (64,1) sum.
        acc_ref[...] += jnp.sum(h, axis=-1, keepdims=True)

    @pl.when(is_last)
    def _accumulate_tail_and_finalize():
        # Only the last tile can contain rows >= n_pts (garbage); select-mask
        # them so relu(garbage) / NaN / Inf cannot bias the mean.
        col = pid * tile_n + lax.broadcasted_iota(jnp.int32, (1, tile_n), 1)
        hm = jnp.where(col < n_pts, h, 0.0)
        s = acc_ref[...] + jnp.sum(hm, axis=-1, keepdims=True)    # (64, 1)
        m = s * (1.0 / n_pts)                                     # mean over true N
        # fc4 applied once, after the mean (exact algebraic rewrite).
        o_ref[...] = (jnp.dot(w4_ref[...], m,
                              preferred_element_type=jnp.float32)
                      + b4_ref[...])                              # (128, 1)


def encoder_forward(x, params, *, tile_n=2048):
    """x: (N, 3).  params: PyTorch-layout [(W (out,in), b (out,)), ...]."""
    (W1, B1), (W2, B2), (W3, B3), (W4, B4) = params
    n, f = x.shape
    assert f == IN_FEATURES and n > 0

    # Block sizing: no padding of x.  Either one block covering the whole array
    # exactly (block dim == array dim is always legal), or sublane-aligned
    # blocks with a ragged, masked last tile.
    if n <= tile_n:
        tile_n = n
    else:
        tile_n = (tile_n // 8) * 8
        assert tile_n >= 8
    grid_n = pl.cdiv(n, tile_n)

    cdt = x.dtype                       # bf16 streaming supported via x's dtype
    w1 = W1.astype(cdt)                 # (16, 3)
    w2 = W2.astype(cdt)                 # (32, 16)
    w3 = W3.astype(cdt)                 # (64, 32)
    w4 = W4.astype(jnp.float32)         # (128, 64): applied once to the f32 mean
    b1 = B1.reshape(H1, 1).astype(jnp.float32)
    b2 = B2.reshape(H2, 1).astype(jnp.float32)
    b3 = B3.reshape(H3, 1).astype(jnp.float32)
    b4 = B4.reshape(H4, 1).astype(jnp.float32)

    def const(shape):
        return pl.BlockSpec(shape, lambda i: (0, 0))

    kernel = functools.partial(encoder_kernel, n_pts=n, tile_n=tile_n)

    out_col = pl.pallas_call(
        kernel,
        out_shape=jax.ShapeDtypeStruct((H4, 1), jnp.float32),
        grid_spec=pltpu.PrefetchScalarGridSpec(
            num_scalar_prefetch=0,
            grid=(grid_n,),
            in_specs=[
                pl.BlockSpec((tile_n, IN_FEATURES), lambda i: (i, 0)),  # raw x stream
                const((H1, IN_FEATURES)), const((H1, 1)),               # resident params
                const((H2, H1)), const((H2, 1)),
                const((H3, H2)), const((H3, 1)),
                const((H4, H3)), const((H4, 1)),
            ],
            out_specs=pl.BlockSpec((H4, 1), lambda i: (0, 0)),          # resident output
            scratch_shapes=[pltpu.VMEM((H3, 1), jnp.float32)],          # (64,1) f32 sum
        ),
        compiler_params=pltpu.CompilerParams(
            dimension_semantics=("arbitrary",),
        ),
    )(x, w1, b1, w2, b2, w3, b3, w4, b4)

    # (128, 1) column -> (1, 128) row (pure relabel of a length-128 vector).
    return out_col.reshape(1, H4)


def init_linear(key, fan_in, fan_out):
    """PyTorch nn.Linear default init; PyTorch layout W: (out, in), b: (out,)."""
    kw, kb = jax.random.split(key)
    bound = 1.0 / np.sqrt(fan_in)
    w = jax.random.uniform(kw, (fan_out, fan_in), jnp.float32, -bound, bound)
    b = jax.random.uniform(kb, (fan_out,), jnp.float32, -bound, bound)
    return w, b


def reference_forward(x, params):
    """Pure-JAX reference matching the PyTorch forward (fc4 before the mean)."""
    h = x
    for i, (w, b) in enumerate(params):
        h = h @ w.T + b
        if i < len(params) - 1:
            h = jnp.maximum(h, 0.0)
    return jnp.mean(h, axis=0, keepdims=True)


if __name__ == "__main__":
    key = jax.random.PRNGKey(0)
    k_x, k1, k2, k3, k4 = jax.random.split(key, 5)

    params = [
        init_linear(k1, IN_FEATURES, H1),
        init_linear(k2, H1, H2),
        init_linear(k3, H2, H3),
        init_linear(k4, H3, H4),
    ]

    # Case 1: 200 context points, single block (block dim == N, no padding).
    N = 200
    x = jax.random.normal(k_x, (N, IN_FEATURES), jnp.float32)
    out = jax.block_until_ready(encoder_forward(x, params))
    ref = reference_forward(x, params)
    assert out.shape == (1, H4), out.shape
    np.testing.assert_allclose(np.asarray(out), np.asarray(ref),
                               rtol=2e-4, atol=1e-5)

    # Case 2: multi-tile path with a ragged, masked last tile (1000 % 256 != 0).
    N2 = 1000
    x2 = jax.random.normal(jax.random.PRNGKey(1), (N2, IN_FEATURES), jnp.float32)
    out2 = jax.block_until_ready(encoder_forward(x2, params, tile_n=256))
    ref2 = reference_forward(x2, params)
    np.testing.assert_allclose(np.asarray(out2), np.asarray(ref2),
                               rtol=2e-4, atol=1e-5)

    print("KERNEL_OK")
</pallas_src>

<mosaic_0001>
module attributes {stable_mosaic.version = 11 : i64} {
  func.func @encoder_kernel(%arg0: i32, %arg1: memref<200x3xf32, #tpu.memory_space<vmem>>, %arg2: memref<16x3xf32, #tpu.memory_space<vmem>>, %arg3: memref<16x1xf32, #tpu.memory_space<vmem>>, %arg4: memref<32x16xf32, #tpu.memory_space<vmem>>, %arg5: memref<32x1xf32, #tpu.memory_space<vmem>>, %arg6: memref<64x32xf32, #tpu.memory_space<vmem>>, %arg7: memref<64x1xf32, #tpu.memory_space<vmem>>, %arg8: memref<128x64xf32, #tpu.memory_space<vmem>>, %arg9: memref<128x1xf32, #tpu.memory_space<vmem>>, %arg10: memref<128x1xf32, #tpu.memory_space<vmem>>, %arg11: memref<64x1xf32, #tpu.memory_space<vmem>>) attributes {dimension_semantics = [#tpu.dimension_semantics<arbitrary>], iteration_bounds = array<i64: 1>, scalar_prefetch = 0 : i64, scratch_operands = 1 : i64, tpu.core_type = #tpu.core_type<tc>, window_params = [{transform_indices = @transform_0, window_bounds = array<i64: 200, 3>}, {pipeline_mode = #tpu.pipeline_mode<synchronous>, transform_indices = @transform_1, window_bounds = array<i64: 16, 3>}, {pipeline_mode = #tpu.pipeline_mode<synchronous>, transform_indices = @transform_2, window_bounds = array<i64: 16, 1>}, {pipeline_mode = #tpu.pipeline_mode<synchronous>, transform_indices = @transform_3, window_bounds = array<i64: 32, 16>}, {pipeline_mode = #tpu.pipeline_mode<synchronous>, transform_indices = @transform_4, window_bounds = array<i64: 32, 1>}, {pipeline_mode = #tpu.pipeline_mode<synchronous>, transform_indices = @transform_5, window_bounds = array<i64: 64, 32>}, {pipeline_mode = #tpu.pipeline_mode<synchronous>, transform_indices = @transform_6, window_bounds = array<i64: 64, 1>}, {pipeline_mode = #tpu.pipeline_mode<synchronous>, transform_indices = @transform_7, window_bounds = array<i64: 128, 64>}, {pipeline_mode = #tpu.pipeline_mode<synchronous>, transform_indices = @transform_8, window_bounds = array<i64: 128, 1>}, {pipeline_mode = #tpu.pipeline_mode<synchronous>, transform_indices = @transform_9, window_bounds = array<i64: 128, 1>}]} {
    %c0_i32 = arith.constant 0 : i32
    %0 = arith.cmpi eq, %arg0, %c0_i32 : i32
    %1 = arith.extui %0 : i1 to i32
    %c0_i32_0 = arith.constant 0 : i32
    %2 = arith.cmpi ne, %1, %c0_i32_0 : i32
    scf.if %2 {
      %cst_22 = arith.constant 0.000000e+00 : f32
      %31 = vector.broadcast %cst_22 : f32 to vector<64x1xf32>
      %c0_23 = arith.constant 0 : index
      %c0_24 = arith.constant 0 : index
      %32 = vector.load %arg11[%c0_23, %c0_24] : memref<64x1xf32, #tpu.memory_space<vmem>>, vector<64x1xf32>
      tpu.vector_store %arg11[%c0_23, %c0_24], %31 {strides = array<i32>} : memref<64x1xf32, #tpu.memory_space<vmem>>, vector<64x1xf32>,
    } else {
    }
    %c0 = arith.constant 0 : index
    %c0_1 = arith.constant 0 : index
    %3 = vector.load %arg1[%c0, %c0_1] : memref<200x3xf32, #tpu.memory_space<vmem>>, vector<200x3xf32>
    %c0_2 = arith.constant 0 : index
    %c0_3 = arith.constant 0 : index
    %4 = vector.load %arg2[%c0_2, %c0_3] : memref<16x3xf32, #tpu.memory_space<vmem>>, vector<16x3xf32>
    %cst = arith.constant dense<0.000000e+00> : vector<16x200xf32>
    %5 = tpu.matmul %4, %3, %cst {dimension_numbers = #tpu.dot_dimension_numbers<[1], [1], [0], [0], [0, 0, 1, 0], [], []>} : vector<16x3xf32>, vector<200x3xf32>, vector<16x200xf32> -> vector<16x200xf32>
    %c0_4 = arith.constant 0 : index
    %c0_5 = arith.constant 0 : index
    %6 = vector.load %arg3[%c0_4, %c0_5] : memref<16x1xf32, #tpu.memory_space<vmem>>, vector<16x1xf32>
    %7 = vector.broadcast %6 : vector<16x1xf32> to vector<16x200xf32>
    %8 = arith.addf %5, %7 : vector<16x200xf32>
    %cst_6 = arith.constant 0.000000e+00 : f32
    %9 = vector.broadcast %cst_6 : f32 to vector<16x200xf32>
    %10 = arith.maximumf %8, %9 : vector<16x200xf32>
    %c0_7 = arith.constant 0 : index
    %c0_8 = arith.constant 0 : index
    %11 = vector.load %arg4[%c0_7, %c0_8] : memref<32x16xf32, #tpu.memory_space<vmem>>, vector<32x16xf32>
    %cst_9 = arith.constant dense<0.000000e+00> : vector<32x200xf32>
    %12 = tpu.matmul %11, %10, %cst_9 {dimension_numbers = #tpu.dot_dimension_numbers<[1], [0], [0], [1], [0, 0, 1, 1], [], []>} : vector<32x16xf32>, vector<16x200xf32>, vector<32x200xf32> -> vector<32x200xf32>
    %c0_10 = arith.constant 0 : index
    %c0_11 = arith.constant 0 : index
    %13 = vector.load %arg5[%c0_10, %c0_11] : memref<32x1xf32, #tpu.memory_space<vmem>>, vector<32x1xf32>
    %14 = vector.broadcast %13 : vector<32x1xf32> to vector<32x200xf32>
    %15 = arith.addf %12, %14 : vector<32x200xf32>
    %cst_12 = arith.constant 0.000000e+00 : f32
    %16 = vector.broadcast %cst_12 : f32 to vector<32x200xf32>
    %17 = arith.maximumf %15, %16 : vector<32x200xf32>
    %c0_13 = arith.constant 0 : index
    %c0_14 = arith.constant 0 : index
    %18 = vector.load %arg6[%c0_13, %c0_14] : memref<64x32xf32, #tpu.memory_space<vmem>>, vector<64x32xf32>
    %cst_15 = arith.constant dense<0.000000e+00> : vector<64x200xf32>
    %19 = tpu.matmul %18, %17, %cst_15 {dimension_numbers = #tpu.dot_dimension_numbers<[1], [0], [0], [1], [0, 0, 1, 1], [], []>} : vector<64x32xf32>, vector<32x200xf32>, vector<64x200xf32> -> vector<64x200xf32>
    %c0_16 = arith.constant 0 : index
    %c0_17 = arith.constant 0 : index
    %20 = vector.load %arg7[%c0_16, %c0_17] : memref<64x1xf32, #tpu.memory_space<vmem>>, vector<64x1xf32>
    %21 = vector.broadcast %20 : vector<64x1xf32> to vector<64x200xf32>
    %22 = arith.addf %19, %21 : vector<64x200xf32>
    %cst_18 = arith.constant 0.000000e+00 : f32
    %23 = vector.broadcast %cst_18 : f32 to vector<64x200xf32>
    %24 = arith.maximumf %22, %23 : vector<64x200xf32>
    %c0_i32_19 = arith.constant 0 : i32
    %25 = arith.cmpi eq, %arg0, %c0_i32_19 : i32
    %true = arith.constant true
    %26 = arith.xori %25, %true : i1
    %27 = arith.extui %26 : i1 to i32
    %c0_i32_20 = arith.constant 0 : i32
    %28 = arith.cmpi ne, %27, %c0_i32_20 : i32
    scf.if %28 {
      %c0_22 = arith.constant 0 : index
      %c0_23 = arith.constant 0 : index
      %31 = vector.load %arg11[%c0_22, %c0_23] : memref<64x1xf32, #tpu.memory_space<vmem>>, vector<64x1xf32>
      %cst_24 = arith.constant dense<0.000000e+00> : vector<64xf32>
      %32 = vector.multi_reduction <add>, %24, %cst_24 [1] : vector<64x200xf32> to vector<64xf32>
      %33 = vector.shape_cast %32 : vector<64xf32> to vector<64x1xf32>
      %34 = arith.addf %31, %33 : vector<64x1xf32>
      %c0_25 = arith.constant 0 : index
      %c0_26 = arith.constant 0 : index
      %35 = vector.load %arg11[%c0_25, %c0_26] : memref<64x1xf32, #tpu.memory_space<vmem>>, vector<64x1xf32>
      tpu.vector_store %arg11[%c0_25, %c0_26], %34 {strides = array<i32>} : memref<64x1xf32, #tpu.memory_space<vmem>>, vector<64x1xf32>,
    } else {
    }
    %29 = arith.extui %25 : i1 to i32
    %c0_i32_21 = arith.constant 0 : i32
    %30 = arith.cmpi ne, %29, %c0_i32_21 : i32
    scf.if %30 {
      %c200_i32 = arith.constant 200 : i32
      %31 = arith.muli %arg0, %c200_i32 : i32
      %32 = tpu.iota {dimensions = array<i32: 1>} : vector<1x200xi32>
      %33 = vector.broadcast %31 : i32 to vector<1x200xi32>
      %34 = arith.addi %33, %32 : vector<1x200xi32>
      %c200_i32_22 = arith.constant 200 : i32
      %35 = vector.broadcast %c200_i32_22 : i32 to vector<1x200xi32>
      %36 = arith.cmpi slt, %34, %35 : vector<1x200xi32>
      %cst_23 = arith.constant 0.000000e+00 : f32
      %37 = vector.shape_cast %36 : vector<1x200xi1> to vector<1x200xi1>
      %38 = vector.broadcast %37 : vector<1x200xi1> to vector<64x200xi1>
      %39 = vector.broadcast %cst_23 : f32 to vector<64x200xf32>
      %40 = arith.select %38, %24, %39 : vector<64x200xi1>, vector<64x200xf32>
      %c0_24 = arith.constant 0 : index
      %c0_25 = arith.constant 0 : index
      %41 = vector.load %arg11[%c0_24, %c0_25] : memref<64x1xf32, #tpu.memory_space<vmem>>, vector<64x1xf32>
      %cst_26 = arith.constant dense<0.000000e+00> : vector<64xf32>
      %42 = vector.multi_reduction <add>, %40, %cst_26 [1] : vector<64x200xf32> to vector<64xf32>
      %43 = vector.shape_cast %42 : vector<64xf32> to vector<64x1xf32>
      %44 = arith.addf %41, %43 : vector<64x1xf32>
      %cst_27 = arith.constant 5.000000e-03 : f32
      %45 = vector.broadcast %cst_27 : f32 to vector<64x1xf32>
      %46 = arith.mulf %44, %45 : vector<64x1xf32>
      %c0_28 = arith.constant 0 : index
      %c0_29 = arith.constant 0 : index
      %47 = vector.load %arg8[%c0_28, %c0_29] : memref<128x64xf32, #tpu.memory_space<vmem>>, vector<128x64xf32>
      %cst_30 = arith.constant dense<0.000000e+00> : vector<128x1xf32>
      %48 = tpu.matmul %47, %46, %cst_30 {dimension_numbers = #tpu.dot_dimension_numbers<[1], [0], [0], [1], [0, 0, 1, 1], [], []>} : vector<128x64xf32>, vector<64x1xf32>, vector<128x1xf32> -> vector<128x1xf32>
      %c0_31 = arith.constant 0 : index
      %c0_32 = arith.constant 0 : index
      %49 = vector.load %arg9[%c0_31, %c0_32] : memref<128x1xf32, #tpu.memory_space<vmem>>, vector<128x1xf32>
      %50 = arith.addf %48, %49 : vector<128x1xf32>
      %c0_33 = arith.constant 0 : index
      %c0_34 = arith.constant 0 : index
      %51 = vector.load %arg10[%c0_33, %c0_34] : memref<128x1xf32, #tpu.memory_space<vmem>>, vector<128x1xf32>
      tpu.vector_store %arg10[%c0_33, %c0_34], %50 {strides = array<i32>} : memref<128x1xf32, #tpu.memory_space<vmem>>, vector<128x1xf32>,
    } else {
    }
    return
  }
  func.func @transform_0(%arg0: i32) -> (i32, i32) {
    %c0_i32 = arith.constant 0 : i32
    %c0_i32_0 = arith.constant 0 : i32
    return %arg0, %c0_i32 : i32, i32
  }
  func.func @transform_1(%arg0: i32) -> (i32, i32) {
    %c0_i32 = arith.constant 0 : i32
    %c0_i32_0 = arith.constant 0 : i32
    %c0_i32_1 = arith.constant 0 : i32
    return %c0_i32, %c0_i32_0 : i32, i32
  }
  func.func @transform_2(%arg0: i32) -> (i32, i32) {
    %c0_i32 = arith.constant 0 : i32
    %c0_i32_0 = arith.constant 0 : i32
    %c0_i32_1 = arith.constant 0 : i32
    return %c0_i32, %c0_i32_0 : i32, i32
  }
  func.func @transform_3(%arg0: i32) -> (i32, i32) {
    %c0_i32 = arith.constant 0 : i32
    %c0_i32_0 = arith.constant 0 : i32
    %c0_i32_1 = arith.constant 0 : i32
    return %c0_i32, %c0_i32_0 : i32, i32
  }
  func.func @transform_4(%arg0: i32) -> (i32, i32) {
    %c0_i32 = arith.constant 0 : i32
    %c0_i32_0 = arith.constant 0 : i32
    %c0_i32_1 = arith.constant 0 : i32
    return %c0_i32, %c0_i32_0 : i32, i32
  }
  func.func @transform_5(%arg0: i32) -> (i32, i32) {
    %c0_i32 = arith.constant 0 : i32
    %c0_i32_0 = arith.constant 0 : i32
    %c0_i32_1 = arith.constant 0 : i32
    return %c0_i32, %c0_i32_0 : i32, i32
  }
  func.func @transform_6(%arg0: i32) -> (i32, i32) {
    %c0_i32 = arith.constant 0 : i32
    %c0_i32_0 = arith.constant 0 : i32
    %c0_i32_1 = arith.constant 0 : i32
    return %c0_i32, %c0_i32_0 : i32, i32
  }
  func.func @transform_7(%arg0: i32) -> (i32, i32) {
    %c0_i32 = arith.constant 0 : i32
    %c0_i32_0 = arith.constant 0 : i32
    %c0_i32_1 = arith.constant 0 : i32
    return %c0_i32, %c0_i32_0 : i32, i32
  }
  func.func @transform_8(%arg0: i32) -> (i32, i32) {
    %c0_i32 = arith.constant 0 : i32
    %c0_i32_0 = arith.constant 0 : i32
    %c0_i32_1 = arith.constant 0 : i32
    return %c0_i32, %c0_i32_0 : i32, i32
  }
  func.func @transform_9(%arg0: i32) -> (i32, i32) {
    %c0_i32 = arith.constant 0 : i32
    %c0_i32_0 = arith.constant 0 : i32
    %c0_i32_1 = arith.constant 0 : i32
    return %c0_i32, %c0_i32_0 : i32, i32
  }
}

</mosaic_0001>

<llo_original>
// kernel: tpu_custom_call.1
$region0: #{tpu_custom_call.1}
  #allocation0 [shape = 'u32[]', space=smem, size = 0x4, offset = 0x4, fixed_abs, tag = 'smem constant byte address 0x4 - core index']
  #allocation1 [shape = 'u32[144,128]{1,0:T(1,128)}', space=vmem, size = 0x12000, scoped, tag = 'internal scratch']
  #allocation2 [shape = 'f32[64,1]{1,0:T(8,128)}', space=vmem, size = 0x8000, scoped, tag = 'scratch operand']
  %s0 = inlined_call_operand.vmem [shape: f32[200,3], index: 0, kind: input, shape index: {}]
  %s1 = inlined_call_operand.vmem [shape: f32[16,3], index: 1, kind: input, shape index: {}]
  %s2 = inlined_call_operand.vmem [shape: f32[16,1], index: 2, kind: input, shape index: {}]
  %s3 = inlined_call_operand.vmem [shape: f32[32,16], index: 3, kind: input, shape index: {}]
  %s4 = inlined_call_operand.vmem [shape: f32[32,1], index: 4, kind: input, shape index: {}]
  %s5 = inlined_call_operand.vmem [shape: f32[64,32], index: 5, kind: input, shape index: {}]
  %s6 = inlined_call_operand.vmem [shape: f32[64,1], index: 6, kind: input, shape index: {}]
  %s7 = inlined_call_operand.vmem [shape: f32[128,64], index: 7, kind: input, shape index: {}]
  %s8 = inlined_call_operand.vmem [shape: f32[128,1], index: 8, kind: input, shape index: {}]
  %s9 = inlined_call_operand.vmem [shape: f32[128,1], index: 9, kind: output, shape index: {}]
  %s10 = sld [smem:[#allocation0]]
  $region58: #{tpu_custom_call.1} parent=0
    _
  %s12 = ssub.s32 1, %s10
  %s13 = scalar_select 0, %s12, %s10
  // Predicated region
  $region2: #{tpu_custom_call.1} parent=0 // pred_check
    _
  $region3: #{tpu_custom_call.1} parent=0 // pred_check_branch
    %15 = sbr.rel (0) target = $region5
  $region4: #{tpu_custom_call.1} parent=0 // pred_region
    _
  $region5: #{tpu_custom_call.1} parent=0 // pred_fallthru
    _
  // Predicated region
  $region6: #{tpu_custom_call.1} parent=0 // pred_check
    _
  $region7: #{tpu_custom_call.1} parent=0 // pred_check_branch
    %17 = sbr.rel (0) target = $region9
  $region8: #{tpu_custom_call.1} parent=0 // pred_region
    _
  $region9: #{tpu_custom_call.1} parent=0 // pred_fallthru
    _
  // Predicated region
  $region10: #{tpu_custom_call.1} parent=0 // pred_check
    _
  $region11: #{tpu_custom_call.1} parent=0 // pred_check_branch
    %19 = sbr.rel (0) target = $region13
  $region12: #{tpu_custom_call.1} parent=0 // pred_region
    _
  $region13: #{tpu_custom_call.1} parent=0 // pred_fallthru
    _
  // Predicated region
  $region14: #{tpu_custom_call.1} parent=0 // pred_check
    _
  $region15: #{tpu_custom_call.1} parent=0 // pred_check_branch
    %21 = sbr.rel (0) target = $region17
  $region16: #{tpu_custom_call.1} parent=0 // pred_region
    _
  $region17: #{tpu_custom_call.1} parent=0 // pred_fallthru
    _
  // Predicated region
  $region18: #{tpu_custom_call.1} parent=0 // pred_check
    _
  $region19: #{tpu_custom_call.1} parent=0 // pred_check_branch
    %23 = sbr.rel (0) target = $region21
  $region20: #{tpu_custom_call.1} parent=0 // pred_region
    _
  $region21: #{tpu_custom_call.1} parent=0 // pred_fallthru
    _
  // Predicated region
  $region22: #{tpu_custom_call.1} parent=0 // pred_check
    _
  $region23: #{tpu_custom_call.1} parent=0 // pred_check_branch
    %25 = sbr.rel (0) target = $region25
  $region24: #{tpu_custom_call.1} parent=0 // pred_region
    _
  $region25: #{tpu_custom_call.1} parent=0 // pred_fallthru
    _
  // Predicated region
  $region26: #{tpu_custom_call.1} parent=0 // pred_check
    _
  $region27: #{tpu_custom_call.1} parent=0 // pred_check_branch
    %27 = sbr.rel (0) target = $region29
  $region28: #{tpu_custom_call.1} parent=0 // pred_region
    _
  $region29: #{tpu_custom_call.1} parent=0 // pred_fallthru
    _
  // Predicated region
  $region30: #{tpu_custom_call.1} parent=0 // pred_check
    _
  $region31: #{tpu_custom_call.1} parent=0 // pred_check_branch
    %29 = sbr.rel (0) target = $region33
  $region32: #{tpu_custom_call.1} parent=0 // pred_region
    _
  $region33: #{tpu_custom_call.1} parent=0 // pred_fallthru
    _
  // Predicated region
  $region34: #{tpu_custom_call.1} parent=0 // pred_check
    _
  $region35: #{tpu_custom_call.1} parent=0 // pred_check_branch
    %31 = sbr.rel (0) target = $region37
  $region36: #{tpu_custom_call.1} parent=0 // pred_region
    _
  $region37: #{tpu_custom_call.1} parent=0 // pred_fallthru
    _
  %p32 = scmp.eq.s32.totalorder 0, 0
  // Predicated region
  $region38: #{tpu_custom_call.1} parent=0 // pred_check
    %p33 = pneg %p32
  $region39: #{tpu_custom_call.1} parent=0 // pred_check_branch
    %35 = sbr.rel (%p33) target = $region41
  $region40: #{tpu_custom_call.1} parent=0 // pred_region
    %vm36 = vcmask 7168
    %37 = vst.msk [vmem:[#allocation2] sm:$0xff] %vm36, 0.0
    %38 = vst.msk [vmem:[#allocation2 + $0x8] sm:$0xff] %vm36, 0.0
    %39 = vst.msk [vmem:[#allocation2 + $0x10] sm:$0xff] %vm36, 0.0
    %40 = vst.msk [vmem:[#allocation2 + $0x18] sm:$0xff] %vm36, 0.0
    %41 = vst.msk [vmem:[#allocation2 + $0x20] sm:$0xff] %vm36, 0.0
    %42 = vst.msk [vmem:[#allocation2 + $0x28] sm:$0xff] %vm36, 0.0
    %43 = vst.msk [vmem:[#allocation2 + $0x30] sm:$0xff] %vm36, 0.0
    %44 = vst.msk [vmem:[#allocation2 + $0x38] sm:$0xff] %vm36, 0.0
  $region41: #{tpu_custom_call.1} parent=0 // pred_fallthru
    _
  %v45 = vld [vmem:[%s0] sm:$0xff]
  %v46 = vld [vmem:[%s0 + $0x8] sm:$0xff]
  %v47 = vld [vmem:[%s0 + $0x10] sm:$0xff]
  %v48 = vld [vmem:[%s0 + $0x18] sm:$0xff]
  %v49 = vld [vmem:[%s0 + $0x20] sm:$0xff]
  %v50 = vld [vmem:[%s0 + $0x28] sm:$0xff]
  %v51 = vld [vmem:[%s0 + $0x30] sm:$0xff]
  %v52 = vld [vmem:[%s0 + $0x38] sm:$0xff]
  %v53 = vld [vmem:[%s0 + $0x40] sm:$0xff]
  %v54 = vld [vmem:[%s0 + $0x48] sm:$0xff]
  %v55 = vld [vmem:[%s0 + $0x50] sm:$0xff]
  %v56 = vld [vmem:[%s0 + $0x58] sm:$0xff]
  %v57 = vld [vmem:[%s0 + $0x60] sm:$0xff]
  %v58 = vld [vmem:[%s0 + $0x68] sm:$0xff]
  %v59 = vld [vmem:[%s0 + $0x70] sm:$0xff]
  %v60 = vld [vmem:[%s0 + $0x78] sm:$0xff]
  %v61 = vld [vmem:[%s0 + $0x80] sm:$0xff]
  %v62 = vld [vmem:[%s0 + $0x88] sm:$0xff]
  %v63 = vld [vmem:[%s0 + $0x90] sm:$0xff]
  %v64 = vld [vmem:[%s0 + $0x98] sm:$0xff]
  %v65 = vld [vmem:[%s0 + $0xa0] sm:$0xff]
  %v66 = vld [vmem:[%s0 + $0xa8] sm:$0xff]
  %v67 = vld [vmem:[%s0 + $0xb0] sm:$0xff]
  %v68 = vld [vmem:[%s0 + $0xb8] sm:$0xff]
  %v69 = vld [vmem:[%s0 + $0xc0] sm:$0xff]
  %v70 = vld [vmem:[%s1] sm:$0xff]
  %v71 = vld [vmem:[%s1 + $0x8] sm:$0xff]
  %v72 = vld [vmem:[%s2] sm:$0xff]
  %v73 = vld [vmem:[%s2 + $0x8] sm:$0xff]
  %75 = vset.pattern.permute.xlu0 0
  %76 = vperm.xlu0 %75, %v72
  %v77 = vpop.permute.xlu0 %76
  %80 = vset.pattern.permute.xlu0 0
  %81 = vperm.xlu0 %80, %v73
  %v82 = vpop.permute.xlu0 %81
  %vm84 = vcmask 23552
  %v86 = vsel %vm84, %v70, 0
  %v89 = vsel %vm84, %v71, 0
  %v92 = vsel %vm84, %v45, 0
  %v95 = vsel %vm84, %v46, 0
  %v98 = vsel %vm84, %v47, 0
  %v101 = vsel %vm84, %v48, 0
  %v104 = vsel %vm84, %v49, 0
  %v107 = vsel %vm84, %v50, 0
  %v110 = vsel %vm84, %v51, 0
  %v113 = vsel %vm84, %v52, 0
  %v116 = vsel %vm84, %v53, 0
  %v119 = vsel %vm84, %v54, 0
  %v122 = vsel %vm84, %v55, 0
  %v125 = vsel %vm84, %v56, 0
  %v128 = vsel %vm84, %v57, 0
  %v131 = vsel %vm84, %v58, 0
  %v134 = vsel %vm84, %v59, 0
  %v137 = vsel %vm84, %v60, 0
  %v140 = vsel %vm84, %v61, 0
  %v143 = vsel %vm84, %v62, 0
  %v146 = vsel %vm84, %v63, 0
  %v149 = vsel %vm84, %v64, 0
  %v152 = vsel %vm84, %v65, 0
  %v155 = vsel %vm84, %v66, 0
  %v158 = vsel %vm84, %v67, 0
  %v161 = vsel %vm84, %v68, 0
  %v164 = vsel %vm84, %v69, 0
  %166 = vmatprep.subr.mxu0 0.0
  %167 = vmatpush1.xpose.msra.mxu0 %v137
  %168 = vmatprep.subr.mxu0 0.0
  %169 = vmatpush1.xpose.msra.mxu0 %v134
  %170 = vmatprep.subr.mxu0 0.0
  %171 = vmatpush1.xpose.msra.mxu0 %v131
  %172 = vmatprep.subr.mxu0 0.0
  %173 = vmatpush1.xpose.msra.mxu0 %v128
  %174 = vmatprep.subr.mxu0 0.0
  %175 = vmatpush1.xpose.msra.mxu0 %v125
  %176 = vmatprep.subr.mxu0 0.0
  %177 = vmatpush1.xpose.msra.mxu0 %v122
  %178 = vmatprep.subr.mxu0 0.0
  %179 = vmatpush1.xpose.msra.mxu0 %v119
  %180 = vmatprep.subr.mxu0 0.0
  %181 = vmatpush1.xpose.msra.mxu0 %v116
  %182 = vmatprep.subr.mxu0 0.0
  %183 = vmatpush1.xpose.msra.mxu0 %v113
  %184 = vmatprep.subr.mxu0 0.0
  %185 = vmatpush1.xpose.msra.mxu0 %v110
  %186 = vmatprep.subr.mxu0 0.0
  %187 = vmatpush1.xpose.msra.mxu0 %v107
  %188 = vmatprep.subr.mxu0 0.0
  %189 = vmatpush1.xpose.msra.mxu0 %v104
  %190 = vmatprep.subr.mxu0 0.0
  %191 = vmatpush1.xpose.msra.mxu0 %v101
  %192 = vmatprep.subr.mxu0 0.0
  %193 = vmatpush1.xpose.msra.mxu0 %v98
  %194 = vmatprep.subr.mxu0 0.0
  %195 = vmatpush1.xpose.msra.mxu0 %v95
  %196 = vmatprep.subr.mxu0 0.0
  %197 = vmatpush1.xpose.msra.mxu0 %v92
  %198 = vmatprep.subr.mxu0 0.0
  %199 = vmatpush2.xpose.msra.mxu0 0.0
  %200 = vmatprep.subr.mxu0 0.0
  %201 = vmatpush2.xpose.msra.mxu0 0.0
  %202 = vmatprep.subr.mxu0 0.0
  %203 = vmatpush2.xpose.msra.mxu0 0.0
  %204 = vmatprep.subr.mxu0 0.0
  %205 = vmatpush2.xpose.msra.mxu0 0.0
  %206 = vmatprep.subr.mxu0 0.0
  %207 = vmatpush2.xpose.msra.mxu0 0.0
  %208 = vmatprep.subr.mxu0 0.0
  %209 = vmatpush2.xpose.msra.mxu0 0.0
  %210 = vmatprep.subr.mxu0 0.0
  %211 = vmatpush2.xpose.msra.mxu0 0.0
  %212 = vmatprep.subr.mxu0 0.0
  %213 = vmatpush2.xpose.msra.mxu0 %v164
  %214 = vmatprep.subr.mxu0 0.0
  %215 = vmatpush2.xpose.msra.mxu0 %v161
  %216 = vmatprep.subr.mxu0 0.0
  %217 = vmatpush2.xpose.msra.mxu0 %v158
  %218 = vmatprep.subr.mxu0 0.0
  %219 = vmatpush2.xpose.msra.mxu0 %v155
  %220 = vmatprep.subr.mxu0 0.0
  %221 = vmatpush2.xpose.msra.mxu0 %v152
  %222 = vmatprep.subr.mxu0 0.0
  %223 = vmatpush2.xpose.msra.mxu0 %v149
  %224 = vmatprep.subr.mxu0 0.0
  %225 = vmatpush2.xpose.msra.mxu0 %v146
  %226 = vmatprep.subr.mxu0 0.0
  %227 = vmatpush2.xpose.msra.mxu0 %v143
  %228 = vmatprep.subr.mxu0 0.0
  %229 = vmatpush2.xpose.msra.mxu0 %v140
  %230 = vmatprep.mubr.f32.mxu0 0.0
  %231 = vmatmul.mubr.f32.gmra.mxu0 %v86
  %v232 = vpop.f32.mrf.mxu0
  %v233 = vadd.f32 %v77, %v232
  %v234 = vpop.f32.mrf.mxu0
  %v235 = vadd.f32 %v77, %v234
  %236 = vmatprep.mubr.f32.mxu0 0.0
  %237 = vmatmul.mubr.f32.gmra.mxu0 %v89
  %v238 = vpop.f32.mrf.mxu0
  %v239 = vadd.f32 %v82, %v238
  %v240 = vpop.f32.mrf.mxu0
  %v241 = vadd.f32 %v82, %v240
  %242 = vdwg.mxu0
  %v243 = vmax.f32 %v233, 0.0
  %v244 = vmax.f32 %v235, 0.0
  %v245 = vmax.f32 %v239, 0.0
  %v246 = vmax.f32 %v241, 0.0
  %v247 = vld [vmem:[%s3] sm:$0xff]
  %v248 = vld [vmem:[%s3 + $0x8] sm:$0xff]
  %v249 = vld [vmem:[%s3 + $0x10] sm:$0xff]
  %v250 = vld [vmem:[%s3 + $0x18] sm:$0xff]
  %v251 = vld [vmem:[%s4] sm:$0xff]
  %v252 = vld [vmem:[%s4 + $0x8] sm:$0xff]
  %v253 = vld [vmem:[%s4 + $0x10] sm:$0xff]
  %v254 = vld [vmem:[%s4 + $0x18] sm:$0xff]
  %256 = vset.pattern.permute.xlu0 0
  %257 = vperm.xlu0 %256, %v251
  %v258 = vpop.permute.xlu0 %257
  %261 = vset.pattern.permute.xlu0 0
  %262 = vperm.xlu0 %261, %v252
  %v263 = vpop.permute.xlu0 %262
  %266 = vset.pattern.permute.xlu0 0
  %267 = vperm.xlu0 %266, %v253
  %v268 = vpop.permute.xlu0 %267
  %271 = vset.pattern.permute.xlu0 0
  %272 = vperm.xlu0 %271, %v254
  %v273 = vpop.permute.xlu0 %272
  %vm275 = vcmask 130048
  %v277 = vsel %vm275, %v247, 0
  %v280 = vsel %vm275, %v248, 0
  %v283 = vsel %vm275, %v249, 0
  %v286 = vsel %vm275, %v250, 0
  %288 = vmatprep.subr.mxu0 0.0
  %289 = vmatpush1.msra.mxu0 0.0
  %290 = vmatprep.subr.mxu0 0.0
  %291 = vmatpush1.msra.mxu0 0.0
  %292 = vmatprep.subr.mxu0 0.0
  %293 = vmatpush1.msra.mxu0 0.0
  %294 = vmatprep.subr.mxu0 0.0
  %295 = vmatpush1.msra.mxu0 0.0
  %296 = vmatprep.subr.mxu0 0.0
  %297 = vmatpush1.msra.mxu0 0.0
  %298 = vmatprep.subr.mxu0 0.0
  %299 = vmatpush1.msra.mxu0 0.0
  %300 = vmatprep.subr.mxu0 0.0
  %301 = vmatpush1.msra.mxu0 0.0
  %302 = vmatprep.subr.mxu0 0.0
  %303 = vmatpush1.msra.mxu0 0.0
  %304 = vmatprep.subr.mxu0 0.0
  %305 = vmatpush1.msra.mxu0 0.0
  %306 = vmatprep.subr.mxu0 0.0
  %307 = vmatpush1.msra.mxu0 0.0
  %308 = vmatprep.subr.mxu0 0.0
  %309 = vmatpush1.msra.mxu0 0.0
  %310 = vmatprep.subr.mxu0 0.0
  %311 = vmatpush1.msra.mxu0 0.0
  %312 = vmatprep.subr.mxu0 0.0
  %313 = vmatpush1.msra.mxu0 0.0
  %314 = vmatprep.subr.mxu0 0.0
  %315 = vmatpush1.msra.mxu0 0.0
  %316 = vmatprep.subr.mxu0 %v246
  %317 = vmatpush1.msra.mxu0 %v245
  %318 = vmatprep.subr.mxu0 %v244
  %319 = vmatpush1.msra.mxu0 %v243
  %320 = vmatprep.subr.mxu0 0.0
  %321 = vmatpush2.msra.mxu0 0.0
  %322 = vmatprep.subr.mxu0 0.0
  %323 = vmatpush2.msra.mxu0 0.0
  %324 = vmatprep.subr.mxu0 0.0
  %325 = vmatpush2.msra.mxu0 0.0
  %326 = vmatprep.subr.mxu0 0.0
  %327 = vmatpush2.msra.mxu0 0.0
  %328 = vmatprep.subr.mxu0 0.0
  %329 = vmatpush2.msra.mxu0 0.0
  %330 = vmatprep.subr.mxu0 0.0
  %331 = vmatpush2.msra.mxu0 0.0
  %332 = vmatprep.subr.mxu0 0.0
  %333 = vmatpush2.msra.mxu0 0.0
  %334 = vmatprep.subr.mxu0 0.0
  %335 = vmatpush2.msra.mxu0 0.0
  %336 = vmatprep.subr.mxu0 0.0
  %337 = vmatpush2.msra.mxu0 0.0
  %338 = vmatprep.subr.mxu0 0.0
  %339 = vmatpush2.msra.mxu0 0.0
  %340 = vmatprep.subr.mxu0 0.0
  %341 = vmatpush2.msra.mxu0 0.0
  %342 = vmatprep.subr.mxu0 0.0
  %343 = vmatpush2.msra.mxu0 0.0
  %344 = vmatprep.subr.mxu0 0.0
  %345 = vmatpush2.msra.mxu0 0.0
  %346 = vmatprep.subr.mxu0 0.0
  %347 = vmatpush2.msra.mxu0 0.0
  %348 = vmatprep.subr.mxu0 0.0
  %349 = vmatpush2.msra.mxu0 0.0
  %350 = vmatprep.subr.mxu0 0.0
  %351 = vmatpush2.msra.mxu0 0.0
  %352 = vmatprep.mubr.f32.mxu0 0.0
  %353 = vmatmul.mubr.f32.gmra.mxu0 %v277
  %v354 = vpop.f32.mrf.mxu0
  %v355 = vadd.f32 %v258, %v354
  %v356 = vpop.f32.mrf.mxu0
  %v357 = vadd.f32 %v258, %v356
  %358 = vmatprep.mubr.f32.mxu0 0.0
  %359 = vmatmul.mubr.f32.gmra.mxu0 %v280
  %v360 = vpop.f32.mrf.mxu0
  %v361 = vadd.f32 %v263, %v360
  %v362 = vpop.f32.mrf.mxu0
  %v363 = vadd.f32 %v263, %v362
  %364 = vmatprep.mubr.f32.mxu0 0.0
  %365 = vmatmul.mubr.f32.gmra.mxu0 %v283
  %v366 = vpop.f32.mrf.mxu0
  %v367 = vadd.f32 %v268, %v366
  %v368 = vpop.f32.mrf.mxu0
  %v369 = vadd.f32 %v268, %v368
  %370 = vmatprep.mubr.f32.mxu0 0.0
  %371 = vmatmul.mubr.f32.gmra.mxu0 %v286
  %v372 = vpop.f32.mrf.mxu0
  %v373 = vadd.f32 %v273, %v372
  %v374 = vpop.f32.mrf.mxu0
  %v375 = vadd.f32 %v273, %v374
  %376 = vdwg.mxu0
  %v377 = vmax.f32 %v355, 0.0
  %v378 = vmax.f32 %v357, 0.0
  %v379 = vmax.f32 %v361, 0.0
  %v380 = vmax.f32 %v363, 0.0
  %v381 = vmax.f32 %v367, 0.0
  %v382 = vmax.f32 %v369, 0.0
  %v383 = vmax.f32 %v373, 0.0
  %v384 = vmax.f32 %v375, 0.0
  %v385 = vld [vmem:[%s5] sm:$0xff]
  %v386 = vld [vmem:[%s5 + $0x8] sm:$0xff]
  %v387 = vld [vmem:[%s5 + $0x10] sm:$0xff]
  %v388 = vld [vmem:[%s5 + $0x18] sm:$0xff]
  %v389 = vld [vmem:[%s5 + $0x20] sm:$0xff]
  %v390 = vld [vmem:[%s5 + $0x28] sm:$0xff]
  %v391 = vld [vmem:[%s5 + $0x30] sm:$0xff]
  %v392 = vld [vmem:[%s5 + $0x38] sm:$0xff]
  %v393 = vld [vmem:[%s6] sm:$0xff]
  %v394 = vld [vmem:[%s6 + $0x8] sm:$0xff]
  %v395 = vld [vmem:[%s6 + $0x10] sm:$0xff]
  %v396 = vld [vmem:[%s6 + $0x18] sm:$0xff]
  %v397 = vld [vmem:[%s6 + $0x20] sm:$0xff]
  %v398 = vld [vmem:[%s6 + $0x28] sm:$0xff]
  %v399 = vld [vmem:[%s6 + $0x30] sm:$0xff]
  %v400 = vld [vmem:[%s6 + $0x38] sm:$0xff]
  %402 = vset.pattern.permute.xlu0 0
  %403 = vperm.xlu0 %402, %v393
  %v404 = vpop.permute.xlu0 %403
  %407 = vset.pattern.permute.xlu0 0
  %408 = vperm.xlu0 %407, %v394
  %v409 = vpop.permute.xlu0 %408
  %412 = vset.pattern.permute.xlu0 0
  %413 = vperm.xlu0 %412, %v395
  %v414 = vpop.permute.xlu0 %413
  %417 = vset.pattern.permute.xlu0 0
  %418 = vperm.xlu0 %417, %v396
  %v419 = vpop.permute.xlu0 %418
  %422 = vset.pattern.permute.xlu0 0
  %423 = vperm.xlu0 %422, %v397
  %v424 = vpop.permute.xlu0 %423
  %427 = vset.pattern.permute.xlu0 0
  %428 = vperm.xlu0 %427, %v398
  %v429 = vpop.permute.xlu0 %428
  %432 = vset.pattern.permute.xlu0 0
  %433 = vperm.xlu0 %432, %v399
  %v434 = vpop.permute.xlu0 %433
  %437 = vset.pattern.permute.xlu0 0
  %438 = vperm.xlu0 %437, %v400
  %v439 = vpop.permute.xlu0 %438
  %vm441 = vcmask 261120
  %v443 = vsel %vm441, %v385, 0
  %v446 = vsel %vm441, %v386, 0
  %v449 = vsel %vm441, %v387, 0
  %v452 = vsel %vm441, %v388, 0
  %v455 = vsel %vm441, %v389, 0
  %v458 = vsel %vm441, %v390, 0
  %v461 = vsel %vm441, %v391, 0
  %v464 = vsel %vm441, %v392, 0
  %466 = vmatprep.subr.mxu0 0.0
  %467 = vmatpush1.msra.mxu0 0.0
  %468 = vmatprep.subr.mxu0 0.0
  %469 = vmatpush1.msra.mxu0 0.0
  %470 = vmatprep.subr.mxu0 0.0
  %471 = vmatpush1.msra.mxu0 0.0
  %472 = vmatprep.subr.mxu0 0.0
  %473 = vmatpush1.msra.mxu0 0.0
  %474 = vmatprep.subr.mxu0 0.0
  %475 = vmatpush1.msra.mxu0 0.0
  %476 = vmatprep.subr.mxu0 0.0
  %477 = vmatpush1.msra.mxu0 0.0
  %478 = vmatprep.subr.mxu0 0.0
  %479 = vmatpush1.msra.mxu0 0.0
  %480 = vmatprep.subr.mxu0 0.0
  %481 = vmatpush1.msra.mxu0 0.0
  %482 = vmatprep.subr.mxu0 0.0
  %483 = vmatpush1.msra.mxu0 0.0
  %484 = vmatprep.subr.mxu0 0.0
  %485 = vmatpush1.msra.mxu0 0.0
  %486 = vmatprep.subr.mxu0 0.0
  %487 = vmatpush1.msra.mxu0 0.0
  %488 = vmatprep.subr.mxu0 0.0
  %489 = vmatpush1.msra.mxu0 0.0
  %490 = vmatprep.subr.mxu0 %v384
  %491 = vmatpush1.msra.mxu0 %v383
  %492 = vmatprep.subr.mxu0 %v382
  %493 = vmatpush1.msra.mxu0 %v381
  %494 = vmatprep.subr.mxu0 %v380
  %495 = vmatpush1.msra.mxu0 %v379
  %496 = vmatprep.subr.mxu0 %v378
  %497 = vmatpush1.msra.mxu0 %v377
  %498 = vmatprep.subr.mxu0 0.0
  %499 = vmatpush2.msra.mxu0 0.0
  %500 = vmatprep.subr.mxu0 0.0
  %501 = vmatpush2.msra.mxu0 0.0
  %502 = vmatprep.subr.mxu0 0.0
  %503 = vmatpush2.msra.mxu0 0.0
  %504 = vmatprep.subr.mxu0 0.0
  %505 = vmatpush2.msra.mxu0 0.0
  %506 = vmatprep.subr.mxu0 0.0
  %507 = vmatpush2.msra.mxu0 0.0
  %508 = vmatprep.subr.mxu0 0.0
  %509 = vmatpush2.msra.mxu0 0.0
  %510 = vmatprep.subr.mxu0 0.0
  %511 = vmatpush2.msra.mxu0 0.0
  %512 = vmatprep.subr.mxu0 0.0
  %513 = vmatpush2.msra.mxu0 0.0
  %514 = vmatprep.subr.mxu0 0.0
  %515 = vmatpush2.msra.mxu0 0.0
  %516 = vmatprep.subr.mxu0 0.0
  %517 = vmatpush2.msra.mxu0 0.0
  %518 = vmatprep.subr.mxu0 0.0
  %519 = vmatpush2.msra.mxu0 0.0
  %520 = vmatprep.subr.mxu0 0.0
  %521 = vmatpush2.msra.mxu0 0.0
  %522 = vmatprep.subr.mxu0 0.0
  %523 = vmatpush2.msra.mxu0 0.0
  %524 = vmatprep.subr.mxu0 0.0
  %525 = vmatpush2.msra.mxu0 0.0
  %526 = vmatprep.subr.mxu0 0.0
  %527 = vmatpush2.msra.mxu0 0.0
  %528 = vmatprep.subr.mxu0 0.0
  %529 = vmatpush2.msra.mxu0 0.0
  %530 = vmatprep.mubr.f32.mxu0 0.0
  %531 = vmatmul.mubr.f32.gmra.mxu0 %v443
  %v532 = vpop.f32.mrf.mxu0
  %v533 = vadd.f32 %v404, %v532
  %v534 = vpop.f32.mrf.mxu0
  %v535 = vadd.f32 %v404, %v534
  %536 = vmatprep.mubr.f32.mxu0 0.0
  %537 = vmatmul.mubr.f32.gmra.mxu0 %v446
  %v538 = vpop.f32.mrf.mxu0
  %v539 = vadd.f32 %v409, %v538
  %v540 = vpop.f32.mrf.mxu0
  %v541 = vadd.f32 %v409, %v540
  %542 = vmatprep.mubr.f32.mxu0 0.0
  %543 = vmatmul.mubr.f32.gmra.mxu0 %v449
  %v544 = vpop.f32.mrf.mxu0
  %v545 = vadd.f32 %v414, %v544
  %v546 = vpop.f32.mrf.mxu0
  %v547 = vadd.f32 %v414, %v546
  %548 = vmatprep.mubr.f32.mxu0 0.0
  %549 = vmatmul.mubr.f32.gmra.mxu0 %v452
  %v550 = vpop.f32.mrf.mxu0
  %v551 = vadd.f32 %v419, %v550
  %v552 = vpop.f32.mrf.mxu0
  %v553 = vadd.f32 %v419, %v552
  %554 = vmatprep.mubr.f32.mxu0 0.0
  %555 = vmatmul.mubr.f32.gmra.mxu0 %v455
  %v556 = vpop.f32.mrf.mxu0
  %v557 = vadd.f32 %v424, %v556
  %v558 = vpop.f32.mrf.mxu0
  %v559 = vadd.f32 %v424, %v558
  %560 = vmatprep.mubr.f32.mxu0 0.0
  %561 = vmatmul.mubr.f32.gmra.mxu0 %v458
  %v562 = vpop.f32.mrf.mxu0
  %v563 = vadd.f32 %v429, %v562
  %v564 = vpop.f32.mrf.mxu0
  %v565 = vadd.f32 %v429, %v564
  %566 = vmatprep.mubr.f32.mxu0 0.0
  %567 = vmatmul.mubr.f32.gmra.mxu0 %v461
  %v568 = vpop.f32.mrf.mxu0
  %v569 = vadd.f32 %v434, %v568
  %v570 = vpop.f32.mrf.mxu0
  %v571 = vadd.f32 %v434, %v570
  %572 = vmatprep.mubr.f32.mxu0 0.0
  %573 = vmatmul.mubr.f32.gmra.mxu0 %v464
  %v574 = vpop.f32.mrf.mxu0
  %v575 = vadd.f32 %v439, %v574
  %v576 = vpop.f32.mrf.mxu0
  %v577 = vadd.f32 %v439, %v576
  %578 = vdwg.mxu0
  %v579 = vmax.f32 %v533, 0.0
  %v580 = vmax.f32 %v535, 0.0
  %v581 = vmax.f32 %v539, 0.0
  %v582 = vmax.f32 %v541, 0.0
  %v583 = vmax.f32 %v545, 0.0
  %v584 = vmax.f32 %v547, 0.0
  %v585 = vmax.f32 %v551, 0.0
  %v586 = vmax.f32 %v553, 0.0
  %v587 = vmax.f32 %v557, 0.0
  %v588 = vmax.f32 %v559, 0.0
  %v589 = vmax.f32 %v563, 0.0
  %v590 = vmax.f32 %v565, 0.0
  %v591 = vmax.f32 %v569, 0.0
  %v592 = vmax.f32 %v571, 0.0
  %v593 = vmax.f32 %v575, 0.0
  %v594 = vmax.f32 %v577, 0.0
  %p595 = scmp.ne.s32.totalorder 0, 0
  // Predicated region
  $region42: #{tpu_custom_call.1} parent=0 // pred_check
    %p596 = pneg %p595
  $region43: #{tpu_custom_call.1} parent=0 // pred_check_branch
    %598 = sbr.rel (%p596) target = $region45
  $region44: #{tpu_custom_call.1} parent=0 // pred_region
    %v599 = vld [vmem:[#allocation2] sm:$0xff]
    %v600 = vld [vmem:[#allocation2 + $0x8] sm:$0xff]
    %v601 = vld [vmem:[#allocation2 + $0x10] sm:$0xff]
    %v602 = vld [vmem:[#allocation2 + $0x18] sm:$0xff]
    %v603 = vld [vmem:[#allocation2 + $0x20] sm:$0xff]
    %v604 = vld [vmem:[#allocation2 + $0x28] sm:$0xff]
    %v605 = vld [vmem:[#allocation2 + $0x30] sm:$0xff]
    %v606 = vld [vmem:[#allocation2 + $0x38] sm:$0xff]
    %vm607 = vcmask 588800
    %v608 = vsel %vm607, %v580, 0.0
    %v609 = vadd.f32 %v579, %v608
    %610 = vadd.xlane.f32.xlu0 %v609
    %v611 = vpop.xlane.xlu0 %610
    %v612 = vsel %vm607, %v582, 0.0
    %v613 = vadd.f32 %v581, %v612
    %614 = vadd.xlane.f32.xlu0 %v613
    %v615 = vpop.xlane.xlu0 %614
    %v616 = vsel %vm607, %v584, 0.0
    %v617 = vadd.f32 %v583, %v616
    %618 = vadd.xlane.f32.xlu0 %v617
    %v619 = vpop.xlane.xlu0 %618
    %v620 = vsel %vm607, %v586, 0.0
    %v621 = vadd.f32 %v585, %v620
    %622 = vadd.xlane.f32.xlu0 %v621
    %v623 = vpop.xlane.xlu0 %622
    %v624 = vsel %vm607, %v588, 0.0
    %v625 = vadd.f32 %v587, %v624
    %626 = vadd.xlane.f32.xlu0 %v625
    %v627 = vpop.xlane.xlu0 %626
    %v628 = vsel %vm607, %v590, 0.0
    %v629 = vadd.f32 %v589, %v628
    %630 = vadd.xlane.f32.xlu0 %v629
    %v631 = vpop.xlane.xlu0 %630
    %v632 = vsel %vm607, %v592, 0.0
    %v633 = vadd.f32 %v591, %v632
    %634 = vadd.xlane.f32.xlu0 %v633
    %v635 = vpop.xlane.xlu0 %634
    %v636 = vsel %vm607, %v594, 0.0
    %v637 = vadd.f32 %v593, %v636
    %638 = vadd.xlane.f32.xlu0 %v637
    %v639 = vpop.xlane.xlu0 %638
    %v640 = vadd.f32 %v599, %v611
    %v641 = vadd.f32 %v600, %v615
    %v642 = vadd.f32 %v601, %v619
    %v643 = vadd.f32 %v602, %v623
    %v644 = vadd.f32 %v603, %v627
    %v645 = vadd.f32 %v604, %v631
    %v646 = vadd.f32 %v605, %v635
    %v647 = vadd.f32 %v606, %v639
    %vm648 = vcmask 7168
    %649 = vst.msk [vmem:[#allocation2] sm:$0xff] %vm648, %v640
    %650 = vst.msk [vmem:[#allocation2 + $0x8] sm:$0xff] %vm648, %v641
    %651 = vst.msk [vmem:[#allocation2 + $0x10] sm:$0xff] %vm648, %v642
    %652 = vst.msk [vmem:[#allocation2 + $0x18] sm:$0xff] %vm648, %v643
    %653 = vst.msk [vmem:[#allocation2 + $0x20] sm:$0xff] %vm648, %v644
    %654 = vst.msk [vmem:[#allocation2 + $0x28] sm:$0xff] %vm648, %v645
    %655 = vst.msk [vmem:[#allocation2 + $0x30] sm:$0xff] %vm648, %v646
    %656 = vst.msk [vmem:[#allocation2 + $0x38] sm:$0xff] %vm648, %v647
  $region45: #{tpu_custom_call.1} parent=0 // pred_fallthru
    _
  // Predicated region
  $region46: #{tpu_custom_call.1} parent=0 // pred_check
    %p657 = pneg %p32
  $region47: #{tpu_custom_call.1} parent=0 // pred_check_branch
    %659 = sbr.rel (%p657) target = $region49
  $region48: #{tpu_custom_call.1} parent=0 // pred_region
    %s660 = smul.u32 0, 200
    %v661 = vlaneseq
    %v662 = vand.u32 %v661, 127
    %v663 = vadd.s32 %v662, 128
    %v664 = vstv %s660
    %v665 = vadd.s32 %v664, %v662
    %v666 = vadd.s32 %v664, %v663
    %vm667 = vcmp.lt.s32.totalorder %v665, 200
    %vm668 = vcmp.lt.s32.totalorder %v666, 200
    %v669 = vsel %vm667, 1, 0
    %v670 = vsel %vm668, 1, 0
    %vm671 = vcmp.eq.s32.totalorder %v669, 1
    %vm672 = vcmp.eq.s32.totalorder %v670, 1
    %v673 = vsel %vm671, %v579, 0.0
    %v674 = vsel %vm672, %v580, 0.0
    %v675 = vsel %vm671, %v581, 0.0
    %v676 = vsel %vm672, %v582, 0.0
    %v677 = vsel %vm671, %v583, 0.0
    %v678 = vsel %vm672, %v584, 0.0
    %v679 = vsel %vm671, %v585, 0.0
    %v680 = vsel %vm672, %v586, 0.0
    %v681 = vsel %vm671, %v587, 0.0
    %v682 = vsel %vm672, %v588, 0.0
    %v683 = vsel %vm671, %v589, 0.0
    %v684 = vsel %vm672, %v590, 0.0
    %v685 = vsel %vm671, %v591, 0.0
    %v686 = vsel %vm672, %v592, 0.0
    %v687 = vsel %vm671, %v593, 0.0
    %v688 = vsel %vm672, %v594, 0.0
    %v689 = vld [vmem:[#allocation2] sm:$0xff]
    %v690 = vld [vmem:[#allocation2 + $0x8] sm:$0xff]
    %v691 = vld [vmem:[#allocation2 + $0x10] sm:$0xff]
    %v692 = vld [vmem:[#allocation2 + $0x18] sm:$0xff]
    %v693 = vld [vmem:[#allocation2 + $0x20] sm:$0xff]
    %v694 = vld [vmem:[#allocation2 + $0x28] sm:$0xff]
    %v695 = vld [vmem:[#allocation2 + $0x30] sm:$0xff]
    %v696 = vld [vmem:[#allocation2 + $0x38] sm:$0xff]
    %vm697 = vcmask 588800
    %v698 = vsel %vm697, %v674, 0.0
    %v699 = vadd.f32 %v673, %v698
    %700 = vadd.xlane.f32.xlu0 %v699
    %v701 = vpop.xlane.xlu0 %700
    %v702 = vsel %vm697, %v676, 0.0
    %v703 = vadd.f32 %v675, %v702
    %704 = vadd.xlane.f32.xlu0 %v703
    %v705 = vpop.xlane.xlu0 %704
    %v706 = vsel %vm697, %v678, 0.0
    %v707 = vadd.f32 %v677, %v706
    %708 = vadd.xlane.f32.xlu0 %v707
    %v709 = vpop.xlane.xlu0 %708
    %v710 = vsel %vm697, %v680, 0.0
    %v711 = vadd.f32 %v679, %v710
    %712 = vadd.xlane.f32.xlu0 %v711
    %v713 = vpop.xlane.xlu0 %712
    %v714 = vsel %vm697, %v682, 0.0
    %v715 = vadd.f32 %v681, %v714
    %716 = vadd.xlane.f32.xlu0 %v715
    %v717 = vpop.xlane.xlu0 %716
    %v718 = vsel %vm697, %v684, 0.0
    %v719 = vadd.f32 %v683, %v718
    %720 = vadd.xlane.f32.xlu0 %v719
    %v721 = vpop.xlane.xlu0 %720
    %v722 = vsel %vm697, %v686, 0.0
    %v723 = vadd.f32 %v685, %v722
    %724 = vadd.xlane.f32.xlu0 %v723
    %v725 = vpop.xlane.xlu0 %724
    %v726 = vsel %vm697, %v688, 0.0
    %v727 = vadd.f32 %v687, %v726
    %728 = vadd.xlane.f32.xlu0 %v727
    %v729 = vpop.xlane.xlu0 %728
    %v730 = vadd.f32 %v689, %v701
    %v731 = vadd.f32 %v690, %v705
    %v732 = vadd.f32 %v691, %v709
    %v733 = vadd.f32 %v692, %v713
    %v734 = vadd.f32 %v693, %v717
    %v735 = vadd.f32 %v694, %v721
    %v736 = vadd.f32 %v695, %v725
    %v737 = vadd.f32 %v696, %v729
    %v738 = vmul.f32 %v730, 0.005
    %v739 = vmul.f32 %v731, 0.005
    %v740 = vmul.f32 %v732, 0.005
    %v741 = vmul.f32 %v733, 0.005
    %v742 = vmul.f32 %v734, 0.005
    %v743 = vmul.f32 %v735, 0.005
    %v744 = vmul.f32 %v736, 0.005
    %v745 = vmul.f32 %v737, 0.005
    %v746 = vld [vmem:[%s7] sm:$0xff]
    %v747 = vld [vmem:[%s7 + $0x8] sm:$0xff]
    %v748 = vld [vmem:[%s7 + $0x10] sm:$0xff]
    %v749 = vld [vmem:[%s7 + $0x18] sm:$0xff]
    %v750 = vld [vmem:[%s7 + $0x20] sm:$0xff]
    %v751 = vld [vmem:[%s7 + $0x28] sm:$0xff]
    %v752 = vld [vmem:[%s7 + $0x30] sm:$0xff]
    %v753 = vld [vmem:[%s7 + $0x38] sm:$0xff]
    %v754 = vld [vmem:[%s7 + $0x40] sm:$0xff]
    %v755 = vld [vmem:[%s7 + $0x48] sm:$0xff]
    %v756 = vld [vmem:[%s7 + $0x50] sm:$0xff]
    %v757 = vld [vmem:[%s7 + $0x58] sm:$0xff]
    %v758 = vld [vmem:[%s7 + $0x60] sm:$0xff]
    %v759 = vld [vmem:[%s7 + $0x68] sm:$0xff]
    %v760 = vld [vmem:[%s7 + $0x70] sm:$0xff]
    %v761 = vld [vmem:[%s7 + $0x78] sm:$0xff]
    %v762 = vld [vmem:[%s8] sm:$0xff]
    %v763 = vld [vmem:[%s8 + $0x8] sm:$0xff]
    %v764 = vld [vmem:[%s8 + $0x10] sm:$0xff]
    %v765 = vld [vmem:[%s8 + $0x18] sm:$0xff]
    %v766 = vld [vmem:[%s8 + $0x20] sm:$0xff]
    %v767 = vld [vmem:[%s8 + $0x28] sm:$0xff]
    %v768 = vld [vmem:[%s8 + $0x30] sm:$0xff]
    %v769 = vld [vmem:[%s8 + $0x38] sm:$0xff]
    %v770 = vld [vmem:[%s8 + $0x40] sm:$0xff]
    %v771 = vld [vmem:[%s8 + $0x48] sm:$0xff]
    %v772 = vld [vmem:[%s8 + $0x50] sm:$0xff]
    %v773 = vld [vmem:[%s8 + $0x58] sm:$0xff]
    %v774 = vld [vmem:[%s8 + $0x60] sm:$0xff]
    %v775 = vld [vmem:[%s8 + $0x68] sm:$0xff]
    %v776 = vld [vmem:[%s8 + $0x70] sm:$0xff]
    %v777 = vld [vmem:[%s8 + $0x78] sm:$0xff]
    %vm778 = vcmask 523264
    %v780 = vsel %vm778, %v746, 0
    %v783 = vsel %vm778, %v747, 0
    %v786 = vsel %vm778, %v748, 0
    %v789 = vsel %vm778, %v749, 0
    %v792 = vsel %vm778, %v750, 0
    %v795 = vsel %vm778, %v751, 0
    %v798 = vsel %vm778, %v752, 0
    %v801 = vsel %vm778, %v753, 0
    %v804 = vsel %vm778, %v754, 0
    %v807 = vsel %vm778, %v755, 0
    %v810 = vsel %vm778, %v756, 0
    %v813 = vsel %vm778, %v757, 0
    %v816 = vsel %vm778, %v758, 0
    %v819 = vsel %vm778, %v759, 0
    %v822 = vsel %vm778, %v760, 0
    %v825 = vsel %vm778, %v761, 0
    %827 = vmatprep.subr.mxu0 0.0
    %828 = vmatpush1.msra.mxu0 0.0
    %829 = vmatprep.subr.mxu0 0.0
    %830 = vmatpush1.msra.mxu0 0.0
    %831 = vmatprep.subr.mxu0 0.0
    %832 = vmatpush1.msra.mxu0 0.0
    %833 = vmatprep.subr.mxu0 0.0
    %834 = vmatpush1.msra.mxu0 0.0
    %835 = vmatprep.subr.mxu0 0.0
    %836 = vmatpush1.msra.mxu0 0.0
    %837 = vmatprep.subr.mxu0 0.0
    %838 = vmatpush1.msra.mxu0 0.0
    %839 = vmatprep.subr.mxu0 0.0
    %840 = vmatpush1.msra.mxu0 0.0
    %841 = vmatprep.subr.mxu0 0.0
    %842 = vmatpush1.msra.mxu0 0.0
    %843 = vmatprep.subr.mxu0 0.0
    %844 = vmatpush1.msra.mxu0 %v745
    %845 = vmatprep.subr.mxu0 0.0
    %846 = vmatpush1.msra.mxu0 %v744
    %847 = vmatprep.subr.mxu0 0.0
    %848 = vmatpush1.msra.mxu0 %v743
    %849 = vmatprep.subr.mxu0 0.0
    %850 = vmatpush1.msra.mxu0 %v742
    %851 = vmatprep.subr.mxu0 0.0
    %852 = vmatpush1.msra.mxu0 %v741
    %853 = vmatprep.subr.mxu0 0.0
    %854 = vmatpush1.msra.mxu0 %v740
    %855 = vmatprep.subr.mxu0 0.0
    %856 = vmatpush1.msra.mxu0 %v739
    %857 = vmatprep.subr.mxu0 0.0
    %858 = vmatpush1.msra.mxu0 %v738
    %859 = vmatprep.subr.mxu0 0.0
    %860 = vmatpush2.msra.mxu0 0.0
    %861 = vmatprep.subr.mxu0 0.0
    %862 = vmatpush2.msra.mxu0 0.0
    %863 = vmatprep.subr.mxu0 0.0
    %864 = vmatpush2.msra.mxu0 0.0
    %865 = vmatprep.subr.mxu0 0.0
    %866 = vmatpush2.msra.mxu0 0.0
    %867 = vmatprep.subr.mxu0 0.0
    %868 = vmatpush2.msra.mxu0 0.0
    %869 = vmatprep.subr.mxu0 0.0
    %870 = vmatpush2.msra.mxu0 0.0
    %871 = vmatprep.subr.mxu0 0.0
    %872 = vmatpush2.msra.mxu0 0.0
    %873 = vmatprep.subr.mxu0 0.0
    %874 = vmatpush2.msra.mxu0 0.0
    %875 = vmatprep.subr.mxu0 0.0
    %876 = vmatpush2.msra.mxu0 0.0
    %877 = vmatprep.subr.mxu0 0.0
    %878 = vmatpush2.msra.mxu0 0.0
    %879 = vmatprep.subr.mxu0 0.0
    %880 = vmatpush2.msra.mxu0 0.0
    %881 = vmatprep.subr.mxu0 0.0
    %882 = vmatpush2.msra.mxu0 0.0
    %883 = vmatprep.subr.mxu0 0.0
    %884 = vmatpush2.msra.mxu0 0.0
    %885 = vmatprep.subr.mxu0 0.0
    %886 = vmatpush2.msra.mxu0 0.0
    %887 = vmatprep.subr.mxu0 0.0
    %888 = vmatpush2.msra.mxu0 0.0
    %889 = vmatprep.subr.mxu0 0.0
    %890 = vmatpush2.msra.mxu0 0.0
    %891 = vmatprep.mubr.f32.mxu0 0.0
    %892 = vmatmul.mubr.f32.gmra.mxu0 %v780
    %v893 = vpop.f32.mrf.mxu0
    %v894 = vadd.f32 %v762, %v893
    %v895 = vpop.f32.mrf.mxu0
    %896 = vmatprep.mubr.f32.mxu0 0.0
    %897 = vmatmul.mubr.f32.gmra.mxu0 %v783
    %v898 = vpop.f32.mrf.mxu0
    %v899 = vadd.f32 %v763, %v898
    %v900 = vpop.f32.mrf.mxu0
    %901 = vmatprep.mubr.f32.mxu0 0.0
    %902 = vmatmul.mubr.f32.gmra.mxu0 %v786
    %v903 = vpop.f32.mrf.mxu0
    %v904 = vadd.f32 %v764, %v903
    %v905 = vpop.f32.mrf.mxu0
    %906 = vmatprep.mubr.f32.mxu0 0.0
    %907 = vmatmul.mubr.f32.gmra.mxu0 %v789
    %v908 = vpop.f32.mrf.mxu0
    %v909 = vadd.f32 %v765, %v908
    %v910 = vpop.f32.mrf.mxu0
    %911 = vmatprep.mubr.f32.mxu0 0.0
    %912 = vmatmul.mubr.f32.gmra.mxu0 %v792
    %v913 = vpop.f32.mrf.mxu0
    %v914 = vadd.f32 %v766, %v913
    %v915 = vpop.f32.mrf.mxu0
    %916 = vmatprep.mubr.f32.mxu0 0.0
    %917 = vmatmul.mubr.f32.gmra.mxu0 %v795
    %v918 = vpop.f32.mrf.mxu0
    %v919 = vadd.f32 %v767, %v918
    %v920 = vpop.f32.mrf.mxu0
    %921 = vmatprep.mubr.f32.mxu0 0.0
    %922 = vmatmul.mubr.f32.gmra.mxu0 %v798
    %v923 = vpop.f32.mrf.mxu0
    %v924 = vadd.f32 %v768, %v923
    %v925 = vpop.f32.mrf.mxu0
    %926 = vmatprep.mubr.f32.mxu0 0.0
    %927 = vmatmul.mubr.f32.gmra.mxu0 %v801
    %v928 = vpop.f32.mrf.mxu0
    %v929 = vadd.f32 %v769, %v928
    %v930 = vpop.f32.mrf.mxu0
    %931 = vmatprep.mubr.f32.mxu0 0.0
    %932 = vmatmul.mubr.f32.gmra.mxu0 %v804
    %v933 = vpop.f32.mrf.mxu0
    %v934 = vadd.f32 %v770, %v933
    %v935 = vpop.f32.mrf.mxu0
    %936 = vmatprep.mubr.f32.mxu0 0.0
    %937 = vmatmul.mubr.f32.gmra.mxu0 %v807
    %v938 = vpop.f32.mrf.mxu0
    %v939 = vadd.f32 %v771, %v938
    %v940 = vpop.f32.mrf.mxu0
    %941 = vmatprep.mubr.f32.mxu0 0.0
    %942 = vmatmul.mubr.f32.gmra.mxu0 %v810
    %v943 = vpop.f32.mrf.mxu0
    %v944 = vadd.f32 %v772, %v943
    %v945 = vpop.f32.mrf.mxu0
    %946 = vmatprep.mubr.f32.mxu0 0.0
    %947 = vmatmul.mubr.f32.gmra.mxu0 %v813
    %v948 = vpop.f32.mrf.mxu0
    %v949 = vadd.f32 %v773, %v948
    %v950 = vpop.f32.mrf.mxu0
    %951 = vmatprep.mubr.f32.mxu0 0.0
    %952 = vmatmul.mubr.f32.gmra.mxu0 %v816
    %v953 = vpop.f32.mrf.mxu0
    %v954 = vadd.f32 %v774, %v953
    %v955 = vpop.f32.mrf.mxu0
    %956 = vmatprep.mubr.f32.mxu0 0.0
    %957 = vmatmul.mubr.f32.gmra.mxu0 %v819
    %v958 = vpop.f32.mrf.mxu0
    %v959 = vadd.f32 %v775, %v958
    %v960 = vpop.f32.mrf.mxu0
    %961 = vmatprep.mubr.f32.mxu0 0.0
    %962 = vmatmul.mubr.f32.gmra.mxu0 %v822
    %v963 = vpop.f32.mrf.mxu0
    %v964 = vadd.f32 %v776, %v963
    %v965 = vpop.f32.mrf.mxu0
    %966 = vmatprep.mubr.f32.mxu0 0.0
    %967 = vmatmul.mubr.f32.gmra.mxu0 %v825
    %v968 = vpop.f32.mrf.mxu0
    %v969 = vadd.f32 %v777, %v968
    %v970 = vpop.f32.mrf.mxu0
    %971 = vdwg.mxu0
    %vm972 = vcmask 7168
    %973 = vst.msk [vmem:[%s9] sm:$0xff] %vm972, %v894
    %974 = vst.msk [vmem:[%s9 + $0x8] sm:$0xff] %vm972, %v899
    %975 = vst.msk [vmem:[%s9 + $0x10] sm:$0xff] %vm972, %v904
    %976 = vst.msk [vmem:[%s9 + $0x18] sm:$0xff] %vm972, %v909
    %977 = vst.msk [vmem:[%s9 + $0x20] sm:$0xff] %vm972, %v914
    %978 = vst.msk [vmem:[%s9 + $0x28] sm:$0xff] %vm972, %v919
    %979 = vst.msk [vmem:[%s9 + $0x30] sm:$0xff] %vm972, %v924
    %980 = vst.msk [vmem:[%s9 + $0x38] sm:$0xff] %vm972, %v929
    %981 = vst.msk [vmem:[%s9 + $0x40] sm:$0xff] %vm972, %v934
    %982 = vst.msk [vmem:[%s9 + $0x48] sm:$0xff] %vm972, %v939
    %983 = vst.msk [vmem:[%s9 + $0x50] sm:$0xff] %vm972, %v944
    %984 = vst.msk [vmem:[%s9 + $0x58] sm:$0xff] %vm972, %v949
    %985 = vst.msk [vmem:[%s9 + $0x60] sm:$0xff] %vm972, %v954
    %986 = vst.msk [vmem:[%s9 + $0x68] sm:$0xff] %vm972, %v959
    %987 = vst.msk [vmem:[%s9 + $0x70] sm:$0xff] %vm972, %v964
    %988 = vst.msk [vmem:[%s9 + $0x78] sm:$0xff] %vm972, %v969
  $region49: #{tpu_custom_call.1} parent=0 // pred_fallthru
    _
  // Predicated region
  $region50: #{tpu_custom_call.1} parent=0 // pred_check
    _
  $region51: #{tpu_custom_call.1} parent=0 // pred_check_branch
    %990 = sbr.rel (0) target = $region53
  $region52: #{tpu_custom_call.1} parent=0 // pred_region
    _
  $region53: #{tpu_custom_call.1} parent=0 // pred_fallthru
    _
  // Predicated region
  $region54: #{tpu_custom_call.1} parent=0 // pred_check
    _
  $region55: #{tpu_custom_call.1} parent=0 // pred_check_branch
    %992 = sbr.rel (0) target = $region57
  $region56: #{tpu_custom_call.1} parent=0 // pred_region
    _
  $region57: #{tpu_custom_call.1} parent=0 // pred_fallthru
    _

</llo_original>
